<compile_context>
chip_gen: v6e
topology: v6e:2x2x1
jax: 0.10.0
libtpu: 0.0.40
codegen_flags: <defaults>
</compile_context>

<pallas_src>
import functools

import jax
import jax.numpy as jnp
from jax import lax
from jax.experimental import pallas as pl
from jax.experimental.pallas import tpu as pltpu

_LANE = 128
_SLAB_W = 1024          # lane width of the flattened slab (8 * 128)
_ROW_ALIGN = 16         # sublane alignment covering both f32 (8) and bf16 (16)
_MAX_BLOCK_ROWS = 1024  # (1024, 1024) f32 block = 4 MiB per stream per buffer


def _cdiv(a, b):
    return -(-a // b)


def _round_up(a, b):
    return _cdiv(a, b) * b


def _pow(base, gamma, log_base):
    """pow(base, gamma).

    Integer gamma -> repeated VPU multiplies (no EUP).  Fractional gamma ->
    exp(gamma * log(base)) reusing the log the loss already computed (only one
    extra EUP op instead of jnp.power's log+exp pair).
    """
    g = float(gamma)
    if g.is_integer() and 0 <= g <= 8:
        gi = int(g)
        if gi == 0:
            return jnp.ones_like(base)
        out = base
        for _ in range(gi - 1):
            out = out * base
        return out
    return jnp.exp(g * log_base)


# ---------------------------------------------------------------------------
# Kernels
# ---------------------------------------------------------------------------
def _focal_tile(logit, target, alpha, gamma, eps):
    # Math in f32 regardless of the I/O dtype.
    x = logit.astype(jnp.float32)
    t = target.astype(jnp.float32)
    p = jax.nn.sigmoid(x)                      # single tanh on TPU

    # eps-floored log arguments.  With p in [0, 1] the floor never changes the
    # value, but it makes the saturated regime (p == 0.0 / 1.0 exactly) immune
    # to `1 - p + eps` being folded to `1 - p` by constant reassociation,
    # which previously yielded log(0) = -inf for |logit| >~ 18.
    p_eps = jnp.maximum(p + eps, eps)
    one_m_p_eps = jnp.maximum(1.0 - p + eps, eps)
    log_p = jnp.log(p_eps)
    log_1mp = jnp.log(one_m_p_eps)

    pow_1mp = _pow(one_m_p_eps, gamma, log_1mp)
    pow_p = _pow(p_eps, gamma, log_p)

    pos = (-alpha) * pow_1mp * t * log_p
    neg = (alpha - 1.0) * pow_p * (1.0 - t) * log_1mp
    return pos + neg


def _focal_elementwise_kernel(logit_ref, target_ref, out_ref, *, alpha, gamma, eps):
    loss = _focal_tile(logit_ref[...], target_ref[...], alpha, gamma, eps)
    out_ref[...] = loss.astype(out_ref.dtype)


def _focal_partial_sum_kernel(logit_ref, target_ref, partial_ref, *,
                              alpha, gamma, eps, block_rows, n_valid):
    loss = _focal_tile(logit_ref[...], target_ref[...], alpha, gamma, eps)

    if n_valid is not None:
        # Static-shape tail mask: zero every padded element exactly, so the
        # reduce result never depends on the pad value (valid for any gamma).
        base = pl.program_id(0) * (block_rows * _SLAB_W)
        row = lax.broadcasted_iota(jnp.int32, loss.shape, 0)
        col = lax.broadcasted_iota(jnp.int32, loss.shape, 1)
        flat = base + row * _SLAB_W + col
        loss = jnp.where(flat < n_valid, loss, 0.0)

    # Per-lane partial sums.  (R, 1024) -> (R//8, 8, 1024) is layout-preserving
    # (it just groups sublane tiles), and the axis-0 reduce is pure vreg adds:
    # no cross-lane XLU reduce or scalar broadcast on the per-step serial path.
    # The final reduce over (num_tiles*8, 1024) f32 happens outside in XLA.
    partial_ref[...] = jnp.sum(loss.reshape(block_rows // 8, 8, _SLAB_W), axis=0)


# ---------------------------------------------------------------------------
# Wrapper (glue: broadcasting, flatten/pad, reduction bookkeeping)
# ---------------------------------------------------------------------------
def _slab_geometry(n):
    """Balanced tiling of n elements into (rows, block_rows, num_tiles)."""
    rows_min = max(1, _cdiv(n, _SLAB_W))
    num_tiles = _cdiv(rows_min, _MAX_BLOCK_ROWS)
    # Keep both v7x TensorCores busy: never collapse mid-sized inputs to a
    # single-tile grid, and prefer an even tile count.
    if num_tiles == 1 and rows_min >= 2 * _ROW_ALIGN:
        num_tiles = 2
    if num_tiles > 1:
        num_tiles = _round_up(num_tiles, 2)
    block_rows = _round_up(_cdiv(rows_min, num_tiles), _ROW_ALIGN)
    rows = block_rows * num_tiles
    return rows, block_rows, num_tiles


def _to_slab(x, rows):
    flat = x.reshape(-1)
    pad = rows * _SLAB_W - flat.size
    if pad:  # skipped entirely for already-aligned sizes (no extra HBM pass)
        # TODO(synk): avoid this full-array pad copy via aligned-prefix + tail.
        flat = jnp.pad(flat, (0, pad), constant_values=0)
    return flat.reshape(rows, _SLAB_W)


def _compiler_params(block_rows, in_itemsizes, out_bytes_per_block):
    block_elems = block_rows * _SLAB_W
    in_bytes = block_elems * sum(in_itemsizes)
    # 2x for double buffering + 8 MiB slack for compiler scratch.  Stays well
    # under v7x's 64 MiB VMEM and raises v5e's 16 MiB scoped default as needed.
    vmem = 2 * (in_bytes + out_bytes_per_block) + (8 << 20)
    return pltpu.CompilerParams(
        dimension_semantics=("parallel",),
        vmem_limit_bytes=int(vmem),
    )


def binary_focal_loss_with_logits(input, target, alpha=0.25, gamma=2.0,
                                  reduction='none', eps=1e-8):
    if input.ndim < 2:
        raise ValueError(f'Invalid input shape, we expect BxCx*. Got: {input.shape}')
    if input.shape[0] != target.shape[0]:
        raise ValueError('Expected input batch_size ({}) to match target batch_size ({}).'
                         .format(input.shape[0], target.shape[0]))

    # bf16 inputs stream at bf16 (half the HBM read bytes); everything else is
    # promoted to f32.  The target is NOT force-downcast to bf16: that would
    # silently quantize non-{0,1} targets (e.g. label smoothing).
    native = (jnp.dtype(jnp.float32), jnp.dtype(jnp.bfloat16))
    logit_dt = jnp.dtype(input.dtype) if jnp.dtype(input.dtype) in native else jnp.dtype(jnp.float32)
    target_dt = jnp.dtype(target.dtype) if jnp.dtype(target.dtype) in native else jnp.dtype(jnp.float32)

    logits = input.astype(logit_dt)
    # torch: target = target.unsqueeze(dim=1); the multiply broadcasts against
    # input.  For the canonical C == 1 case this broadcast is a no-op.
    # TODO(synk): for C > 1, reuse the target block across channels via the
    # index_map instead of materializing the broadcast in HBM.
    target_b = jnp.broadcast_to(jnp.expand_dims(target, 1).astype(target_dt), logits.shape)

    n = logits.size
    rows, block_rows, num_tiles = _slab_geometry(n)
    logits2d = _to_slab(logits, rows)
    target2d = _to_slab(target_b, rows)
    padded = (rows * _SLAB_W != n)

    grid = (num_tiles,)
    tile = pl.BlockSpec((block_rows, _SLAB_W), lambda i: (i, 0))
    in_itemsizes = (logit_dt.itemsize, target_dt.itemsize)

    if reduction == 'none':
        out_dtype = jnp.result_type(logit_dt, target_dt)
        kernel = functools.partial(_focal_elementwise_kernel,
                                   alpha=alpha, gamma=gamma, eps=eps)
        cparams = _compiler_params(block_rows, in_itemsizes,
                                   block_rows * _SLAB_W * jnp.dtype(out_dtype).itemsize)
        loss2d = pl.pallas_call(
            kernel,
            out_shape=jax.ShapeDtypeStruct((rows, _SLAB_W), out_dtype),
            grid=grid,
            in_specs=[tile, tile],
            out_specs=tile,
            compiler_params=cparams,
        )(logits2d, target2d)
        loss_full = loss2d.reshape(-1)[:n].reshape(logits.shape)
        # torch: loss_tmp.squeeze(dim=1) only drops the channel axis when it is size 1.
        if logits.shape[1] == 1:
            loss_full = jnp.squeeze(loss_full, axis=1)
        return loss_full

    if reduction in ('mean', 'sum'):
        kernel = functools.partial(_focal_partial_sum_kernel,
                                   alpha=alpha, gamma=gamma, eps=eps,
                                   block_rows=block_rows,
                                   n_valid=(n if padded else None))
        cparams = _compiler_params(block_rows, in_itemsizes, 8 * _SLAB_W * 4)
        partials = pl.pallas_call(
            kernel,
            out_shape=jax.ShapeDtypeStruct((num_tiles * 8, _SLAB_W), jnp.float32),
            grid=grid,
            in_specs=[tile, tile],
            out_specs=pl.BlockSpec((8, _SLAB_W), lambda i: (i, 0)),
            compiler_params=cparams,
        )(logits2d, target2d)
        total = jnp.sum(partials)
        if reduction == 'sum':
            return total
        return total / jnp.float32(n)

    raise NotImplementedError(f'Invalid reduction mode: {reduction}')


class BinaryFocalLossWithLogits:
    """JAX/Pallas port of the PyTorch BinaryFocalLossWithLogits module."""

    def __init__(self, alpha: float, gamma: float = 2.0, reduction: str = 'none'):
        self.alpha = alpha
        self.gamma = gamma
        self.reduction = reduction
        self.eps = 1e-8

    def __call__(self, input, target):
        return binary_focal_loss_with_logits(input, target, self.alpha,
                                             self.gamma, self.reduction, self.eps)


# ---------------------------------------------------------------------------
# Pure-JAX reference (torch formula, with the same eps floor) for validation
# ---------------------------------------------------------------------------
def _ref_focal(input, target, alpha, gamma, eps, reduction):
    p = jax.nn.sigmoid(input.astype(jnp.float32))
    t = jnp.expand_dims(target.astype(jnp.float32), 1)
    p_eps = jnp.maximum(p + eps, eps)
    one_m_p_eps = jnp.maximum(1.0 - p + eps, eps)
    loss = (-alpha * jnp.power(one_m_p_eps, gamma) * t * jnp.log(p_eps)
            - (1.0 - alpha) * jnp.power(p_eps, gamma) * (1.0 - t) * jnp.log(one_m_p_eps))
    if loss.shape[1] == 1:
        loss = jnp.squeeze(loss, axis=1)
    if reduction == 'none':
        return loss
    if reduction == 'mean':
        return jnp.mean(loss)
    return jnp.sum(loss)


if __name__ == "__main__":
    key = jax.random.PRNGKey(0)
    k1, k2, k3, k4 = jax.random.split(key, 4)

    N, C, H, W = 2, 1, 16, 16  # input is (N, 1, H, W), target is (N, H, W)
    logits = jax.random.normal(k1, (N, C, H, W), dtype=jnp.float32) * 3.0
    target = (jax.random.uniform(k2, (N, H, W)) > 0.5).astype(jnp.float32)

    # reduction='none' (elementwise kernel)
    loss_none_mod = BinaryFocalLossWithLogits(alpha=0.25, gamma=2.0, reduction='none')
    out_none = jax.block_until_ready(loss_none_mod(logits, target))
    ref_none = _ref_focal(logits, target, 0.25, 2.0, 1e-8, 'none')
    assert out_none.shape == (N, H, W), out_none.shape
    assert jnp.allclose(out_none, ref_none, rtol=1e-5, atol=1e-5)

    # reduction='mean' (parallel per-tile per-lane partial sums + tail mask)
    loss_mean_mod = BinaryFocalLossWithLogits(alpha=0.25, gamma=2.0, reduction='mean')
    out_mean = jax.block_until_ready(loss_mean_mod(logits, target))
    ref_mean = _ref_focal(logits, target, 0.25, 2.0, 1e-8, 'mean')
    assert jnp.allclose(out_mean, ref_mean, rtol=1e-5, atol=1e-5)

    # reduction='sum'
    loss_sum_mod = BinaryFocalLossWithLogits(alpha=0.25, gamma=2.0, reduction='sum')
    out_sum = jax.block_until_ready(loss_sum_mod(logits, target))
    ref_sum = _ref_focal(logits, target, 0.25, 2.0, 1e-8, 'sum')
    assert jnp.allclose(out_sum, ref_sum, rtol=1e-5, atol=1e-4)

    # fractional gamma (exercises the exp(g*log) EUP-reuse path)
    loss_frac_mod = BinaryFocalLossWithLogits(alpha=0.25, gamma=1.5, reduction='none')
    out_frac = jax.block_until_ready(loss_frac_mod(logits, target))
    ref_frac = _ref_focal(logits, target, 0.25, 1.5, 1e-8, 'none')
    assert jnp.allclose(out_frac, ref_frac, rtol=1e-4, atol=1e-6)

    # multi-tile grid + in-kernel tail masking (forced >=2 parallel tiles)
    big_logits = jax.random.normal(k3, (2, 1, 160, 160), dtype=jnp.float32) * 2.0
    big_target = (jax.random.uniform(k4, (2, 160, 160)) > 0.5).astype(jnp.float32)
    out_big = jax.block_until_ready(
        binary_focal_loss_with_logits(big_logits, big_target, 0.25, 2.0, 'mean'))
    ref_big = _ref_focal(big_logits, big_target, 0.25, 2.0, 1e-8, 'mean')
    assert jnp.allclose(out_big, ref_big, rtol=1e-5, atol=1e-5)

    # kornia docstring example (checks eps-saturation semantics at large logits)
    doc_logits = jnp.array([[[[6.325]]], [[[5.26]]], [[[87.49]]]], dtype=jnp.float32)
    doc_labels = jnp.array([[[1.0]], [[1.0]], [[0.0]]], dtype=jnp.float32)
    doc_out = jax.block_until_ready(
        binary_focal_loss_with_logits(doc_logits, doc_labels, 0.25, 2.0, 'mean'))
    assert jnp.allclose(doc_out, 4.6052, rtol=0.0, atol=1e-3), doc_out

    print("KERNEL_OK")
</pallas_src>

<mosaic_0001>
module attributes {stable_mosaic.version = 11 : i64} {
  func.func @_focal_elementwise_kernel(%arg0: i32, %arg1: memref<16x1024xf32, #tpu.memory_space<vmem>>, %arg2: memref<16x1024xf32, #tpu.memory_space<vmem>>, %arg3: memref<16x1024xf32, #tpu.memory_space<vmem>>) attributes {dimension_semantics = [#tpu.dimension_semantics<parallel>], iteration_bounds = array<i64: 1>, scalar_prefetch = 0 : i64, scratch_operands = 0 : i64, tpu.core_type = #tpu.core_type<tc>, window_params = [{transform_indices = @transform_0, window_bounds = array<i64: 16, 1024>}, {transform_indices = @transform_1, window_bounds = array<i64: 16, 1024>}, {transform_indices = @transform_2, window_bounds = array<i64: 16, 1024>}]} {
    %c0 = arith.constant 0 : index
    %c0_0 = arith.constant 0 : index
    %0 = vector.load %arg1[%c0, %c0_0] : memref<16x1024xf32, #tpu.memory_space<vmem>>, vector<16x1024xf32>
    %c0_1 = arith.constant 0 : index
    %c0_2 = arith.constant 0 : index
    %1 = vector.load %arg2[%c0_1, %c0_2] : memref<16x1024xf32, #tpu.memory_space<vmem>>, vector<16x1024xf32>
    %2 = arith.negf %0 : vector<16x1024xf32>
    %3 = math.exp %2 : vector<16x1024xf32>
    %cst = arith.constant 1.000000e+00 : f32
    %4 = vector.broadcast %cst : f32 to vector<16x1024xf32>
    %5 = arith.addf %4, %3 : vector<16x1024xf32>
    %6 = arith.divf %4, %5 : vector<16x1024xf32>
    %cst_3 = arith.constant 9.99999993E-9 : f32
    %7 = vector.broadcast %cst_3 : f32 to vector<16x1024xf32>
    %8 = arith.addf %6, %7 : vector<16x1024xf32>
    %cst_4 = arith.constant 9.99999993E-9 : f32
    %9 = vector.broadcast %cst_4 : f32 to vector<16x1024xf32>
    %10 = arith.maximumf %8, %9 : vector<16x1024xf32>
    %cst_5 = arith.constant 1.000000e+00 : f32
    %11 = vector.broadcast %cst_5 : f32 to vector<16x1024xf32>
    %12 = arith.subf %11, %6 : vector<16x1024xf32>
    %cst_6 = arith.constant 9.99999993E-9 : f32
    %13 = vector.broadcast %cst_6 : f32 to vector<16x1024xf32>
    %14 = arith.addf %12, %13 : vector<16x1024xf32>
    %cst_7 = arith.constant 9.99999993E-9 : f32
    %15 = vector.broadcast %cst_7 : f32 to vector<16x1024xf32>
    %16 = arith.maximumf %14, %15 : vector<16x1024xf32>
    %17 = math.log %10 : vector<16x1024xf32>
    %18 = math.log %16 : vector<16x1024xf32>
    %19 = arith.mulf %16, %16 : vector<16x1024xf32>
    %20 = arith.mulf %10, %10 : vector<16x1024xf32>
    %cst_8 = arith.constant -2.500000e-01 : f32
    %21 = vector.broadcast %cst_8 : f32 to vector<16x1024xf32>
    %22 = arith.mulf %21, %19 : vector<16x1024xf32>
    %23 = arith.mulf %22, %1 : vector<16x1024xf32>
    %24 = arith.mulf %23, %17 : vector<16x1024xf32>
    %cst_9 = arith.constant -7.500000e-01 : f32
    %25 = vector.broadcast %cst_9 : f32 to vector<16x1024xf32>
    %26 = arith.mulf %25, %20 : vector<16x1024xf32>
    %cst_10 = arith.constant 1.000000e+00 : f32
    %27 = vector.broadcast %cst_10 : f32 to vector<16x1024xf32>
    %28 = arith.subf %27, %1 : vector<16x1024xf32>
    %29 = arith.mulf %26, %28 : vector<16x1024xf32>
    %30 = arith.mulf %29, %18 : vector<16x1024xf32>
    %31 = arith.addf %24, %30 : vector<16x1024xf32>
    %c0_11 = arith.constant 0 : index
    %c0_12 = arith.constant 0 : index
    %32 = vector.load %arg3[%c0_11, %c0_12] : memref<16x1024xf32, #tpu.memory_space<vmem>>, vector<16x1024xf32>
    tpu.vector_store %arg3[%c0_11, %c0_12], %31 {strides = array<i32>} : memref<16x1024xf32, #tpu.memory_space<vmem>>, vector<16x1024xf32>,
    return
  }
  func.func @transform_0(%arg0: i32) -> (i32, i32) {
    %c0_i32 = arith.constant 0 : i32
    %c0_i32_0 = arith.constant 0 : i32
    return %arg0, %c0_i32 : i32, i32
  }
  func.func @transform_1(%arg0: i32) -> (i32, i32) {
    %c0_i32 = arith.constant 0 : i32
    %c0_i32_0 = arith.constant 0 : i32
    return %arg0, %c0_i32 : i32, i32
  }
  func.func @transform_2(%arg0: i32) -> (i32, i32) {
    %c0_i32 = arith.constant 0 : i32
    %c0_i32_0 = arith.constant 0 : i32
    return %arg0, %c0_i32 : i32, i32
  }
}

</mosaic_0001>

<llo_original>
// kernel: tpu_custom_call.1
$region0: #{tpu_custom_call.1}
  #allocation0 [shape = 'u32[]', space=smem, size = 0x4, offset = 0x4, fixed_abs, tag = 'smem constant byte address 0x4 - core index']
  #allocation1 [shape = 'u32[144,128]{1,0:T(1,128)}', space=vmem, size = 0x12000, scoped, tag = 'internal scratch']
  %s0 = inlined_call_operand.hbm [shape: f32[16,1024], index: 0, kind: input, shape index: {}]
  %s1 = inlined_call_operand.hbm [shape: f32[16,1024], index: 1, kind: input, shape index: {}]
  %s2 = inlined_call_operand.hbm [shape: f32[16,1024], index: 2, kind: output, shape index: {}]
  %s3 = sld [smem:[#allocation0]]
  $region26: #{tpu_custom_call.1} parent=0
    _
  %s5 = ssub.s32 1, %s3
  %s6 = scalar_select 0, %s5, %s3
  $region1: #{tpu_custom_call.1} parent=0
    #allocation2 [shape = 'u8[65536]{0}', space=vmem, size = 0x10000, scoped, tag = 'input window, operand 0, single buffered']
    #allocation3 [shape = 's32[1]{0}', space=sflag, size = 0x4, scoped, tag = 'scoped memory for tpu_custom_call.1']
    #allocation4 [shape = 's32[1]{0}', space=sflag, size = 0x4, scoped, tag = 'scoped memory for tpu_custom_call.1']
    #allocation5 [shape = 'u8[65536]{0}', space=vmem, size = 0x10000, scoped, tag = 'input window, operand 1, single buffered']
    #allocation6 [shape = 's32[1]{0}', space=sflag, size = 0x4, scoped, tag = 'scoped memory for tpu_custom_call.1']
    #allocation7 [shape = 'u8[65536]{0}', space=vmem, size = 0x10000, scoped, tag = 'output window, operand 0, single buffered']
    %7 = vsyncpa [#allocation3], 0
    %8 = vsyncpa [#allocation6], 0
    %9 = vsyncpa [#allocation4], 0
    // Predicated region
    $region2: #{tpu_custom_call.1} parent=1 // pred_check
      _
    $region3: #{tpu_custom_call.1} parent=1 // pred_check_branch
      %11 = sbr.rel (0) target = $region5
    $region4: #{tpu_custom_call.1} parent=1 // pred_region
      %s13 = ssub.s32 2048, 2048
      %14 = vsyncadd [#allocation3], %s13
      %s15 = sshll.u32 [#allocation2], 4
      %s16 = int_to_ptr.vmem [resolvable:$true] %s15
      %21 = dma.hbm_to_vmem [thread:$0]  %s0, 2048, %s16, [#allocation3], 1024, 1024, 64
    $region5: #{tpu_custom_call.1} parent=1 // pred_fallthru
      _
    // Predicated region
    $region6: #{tpu_custom_call.1} parent=1 // pred_check
      _
    $region7: #{tpu_custom_call.1} parent=1 // pred_check_branch
      %23 = sbr.rel (0) target = $region9
    $region8: #{tpu_custom_call.1} parent=1 // pred_region
      %s25 = ssub.s32 2048, 2048
      %26 = vsyncadd [#allocation6], %s25
      %s27 = sshll.u32 [#allocation5], 4
      %s28 = int_to_ptr.vmem [resolvable:$true] %s27
      %33 = dma.hbm_to_vmem [thread:$0]  %s1, 2048, %s28, [#allocation6], 1024, 1024, 64
    $region9: #{tpu_custom_call.1} parent=1 // pred_fallthru
      _
    // Predicated region
    $region10: #{tpu_custom_call.1} parent=1 // pred_check
      _
    $region11: #{tpu_custom_call.1} parent=1 // pred_check_branch
      %35 = sbr.rel (0) target = $region13
    $region12: #{tpu_custom_call.1} parent=1 // pred_region
      %36 = dma.done [#allocation3], 2048
    $region13: #{tpu_custom_call.1} parent=1 // pred_fallthru
      _
    // Predicated region
    $region14: #{tpu_custom_call.1} parent=1 // pred_check
      _
    $region15: #{tpu_custom_call.1} parent=1 // pred_check_branch
      %38 = sbr.rel (0) target = $region17
    $region16: #{tpu_custom_call.1} parent=1 // pred_region
      %39 = dma.done [#allocation6], 2048
    $region17: #{tpu_custom_call.1} parent=1 // pred_fallthru
      _
    %v40 = vld [vmem:[#allocation2] sm:$0xff]
    %v41 = vld [vmem:[#allocation2 + $0x8] sm:$0xff]
    %v42 = vld [vmem:[#allocation2 + $0x10] sm:$0xff]
    %v43 = vld [vmem:[#allocation2 + $0x18] sm:$0xff]
    %v44 = vld [vmem:[#allocation2 + $0x20] sm:$0xff]
    %v45 = vld [vmem:[#allocation2 + $0x28] sm:$0xff]
    %v46 = vld [vmem:[#allocation2 + $0x30] sm:$0xff]
    %v47 = vld [vmem:[#allocation2 + $0x38] sm:$0xff]
    %v48 = vld [vmem:[#allocation2 + $0x40] sm:$0xff]
    %v49 = vld [vmem:[#allocation2 + $0x48] sm:$0xff]
    %v50 = vld [vmem:[#allocation2 + $0x50] sm:$0xff]
    %v51 = vld [vmem:[#allocation2 + $0x58] sm:$0xff]
    %v52 = vld [vmem:[#allocation2 + $0x60] sm:$0xff]
    %v53 = vld [vmem:[#allocation2 + $0x68] sm:$0xff]
    %v54 = vld [vmem:[#allocation2 + $0x70] sm:$0xff]
    %v55 = vld [vmem:[#allocation2 + $0x78] sm:$0xff]
    %v56 = vld [vmem:[#allocation5] sm:$0xff]
    %v57 = vld [vmem:[#allocation5 + $0x8] sm:$0xff]
    %v58 = vld [vmem:[#allocation5 + $0x10] sm:$0xff]
    %v59 = vld [vmem:[#allocation5 + $0x18] sm:$0xff]
    %v60 = vld [vmem:[#allocation5 + $0x20] sm:$0xff]
    %v61 = vld [vmem:[#allocation5 + $0x28] sm:$0xff]
    %v62 = vld [vmem:[#allocation5 + $0x30] sm:$0xff]
    %v63 = vld [vmem:[#allocation5 + $0x38] sm:$0xff]
    %v64 = vld [vmem:[#allocation5 + $0x40] sm:$0xff]
    %v65 = vld [vmem:[#allocation5 + $0x48] sm:$0xff]
    %v66 = vld [vmem:[#allocation5 + $0x50] sm:$0xff]
    %v67 = vld [vmem:[#allocation5 + $0x58] sm:$0xff]
    %v68 = vld [vmem:[#allocation5 + $0x60] sm:$0xff]
    %v69 = vld [vmem:[#allocation5 + $0x68] sm:$0xff]
    %v70 = vld [vmem:[#allocation5 + $0x70] sm:$0xff]
    %v71 = vld [vmem:[#allocation5 + $0x78] sm:$0xff]
    %v72 = vxor.u32 %v40, 2147483648
    %v73 = vxor.u32 %v41, 2147483648
    %v74 = vxor.u32 %v42, 2147483648
    %v75 = vxor.u32 %v43, 2147483648
    %v76 = vxor.u32 %v44, 2147483648
    %v77 = vxor.u32 %v45, 2147483648
    %v78 = vxor.u32 %v46, 2147483648
    %v79 = vxor.u32 %v47, 2147483648
    %v80 = vxor.u32 %v48, 2147483648
    %v81 = vxor.u32 %v49, 2147483648
    %v82 = vxor.u32 %v50, 2147483648
    %v83 = vxor.u32 %v51, 2147483648
    %v84 = vxor.u32 %v52, 2147483648
    %v85 = vxor.u32 %v53, 2147483648
    %v86 = vxor.u32 %v54, 2147483648
    %v87 = vxor.u32 %v55, 2147483648
    %v88 = vmul.f32 %v72, 1.442695
    %v89 = vpow.pop %v88
    %v90 = vmul.f32 %v73, 1.442695
    %v91 = vpow.pop %v90
    %v92 = vmul.f32 %v74, 1.442695
    %v93 = vpow.pop %v92
    %v94 = vmul.f32 %v75, 1.442695
    %v95 = vpow.pop %v94
    %v96 = vmul.f32 %v76, 1.442695
    %v97 = vpow.pop %v96
    %v98 = vmul.f32 %v77, 1.442695
    %v99 = vpow.pop %v98
    %v100 = vmul.f32 %v78, 1.442695
    %v101 = vpow.pop %v100
    %v102 = vmul.f32 %v79, 1.442695
    %v103 = vpow.pop %v102
    %v104 = vmul.f32 %v80, 1.442695
    %v105 = vpow.pop %v104
    %v106 = vmul.f32 %v81, 1.442695
    %v107 = vpow.pop %v106
    %v108 = vmul.f32 %v82, 1.442695
    %v109 = vpow.pop %v108
    %v110 = vmul.f32 %v83, 1.442695
    %v111 = vpow.pop %v110
    %v112 = vmul.f32 %v84, 1.442695
    %v113 = vpow.pop %v112
    %v114 = vmul.f32 %v85, 1.442695
    %v115 = vpow.pop %v114
    %v116 = vmul.f32 %v86, 1.442695
    %v117 = vpow.pop %v116
    %v118 = vmul.f32 %v87, 1.442695
    %v119 = vpow.pop %v118
    %v120 = vadd.f32 %v89, 1.0
    %v121 = vadd.f32 %v91, 1.0
    %v122 = vadd.f32 %v93, 1.0
    %v123 = vadd.f32 %v95, 1.0
    %v124 = vadd.f32 %v97, 1.0
    %v125 = vadd.f32 %v99, 1.0
    %v126 = vadd.f32 %v101, 1.0
    %v127 = vadd.f32 %v103, 1.0
    %v128 = vadd.f32 %v105, 1.0
    %v129 = vadd.f32 %v107, 1.0
    %v130 = vadd.f32 %v109, 1.0
    %v131 = vadd.f32 %v111, 1.0
    %v132 = vadd.f32 %v113, 1.0
    %v133 = vadd.f32 %v115, 1.0
    %v134 = vadd.f32 %v117, 1.0
    %v135 = vadd.f32 %v119, 1.0
    %v136 = vrcp.pop %v120
    %v137 = vmul.f32 1.0, %v136
    %v138 = vrcp.pop %v121
    %v139 = vmul.f32 1.0, %v138
    %v140 = vrcp.pop %v122
    %v141 = vmul.f32 1.0, %v140
    %v142 = vrcp.pop %v123
    %v143 = vmul.f32 1.0, %v142
    %v144 = vrcp.pop %v124
    %v145 = vmul.f32 1.0, %v144
    %v146 = vrcp.pop %v125
    %v147 = vmul.f32 1.0, %v146
    %v148 = vrcp.pop %v126
    %v149 = vmul.f32 1.0, %v148
    %v150 = vrcp.pop %v127
    %v151 = vmul.f32 1.0, %v150
    %v152 = vrcp.pop %v128
    %v153 = vmul.f32 1.0, %v152
    %v154 = vrcp.pop %v129
    %v155 = vmul.f32 1.0, %v154
    %v156 = vrcp.pop %v130
    %v157 = vmul.f32 1.0, %v156
    %v158 = vrcp.pop %v131
    %v159 = vmul.f32 1.0, %v158
    %v160 = vrcp.pop %v132
    %v161 = vmul.f32 1.0, %v160
    %v162 = vrcp.pop %v133
    %v163 = vmul.f32 1.0, %v162
    %v164 = vrcp.pop %v134
    %v165 = vmul.f32 1.0, %v164
    %v166 = vrcp.pop %v135
    %v167 = vmul.f32 1.0, %v166
    %v168 = vadd.f32 %v137, 1e-08
    %v169 = vadd.f32 %v139, 1e-08
    %v170 = vadd.f32 %v141, 1e-08
    %v171 = vadd.f32 %v143, 1e-08
    %v172 = vadd.f32 %v145, 1e-08
    %v173 = vadd.f32 %v147, 1e-08
    %v174 = vadd.f32 %v149, 1e-08
    %v175 = vadd.f32 %v151, 1e-08
    %v176 = vadd.f32 %v153, 1e-08
    %v177 = vadd.f32 %v155, 1e-08
    %v178 = vadd.f32 %v157, 1e-08
    %v179 = vadd.f32 %v159, 1e-08
    %v180 = vadd.f32 %v161, 1e-08
    %v181 = vadd.f32 %v163, 1e-08
    %v182 = vadd.f32 %v165, 1e-08
    %v183 = vadd.f32 %v167, 1e-08
    %v184 = vmax.f32 %v168, 1e-08
    %v185 = vmax.f32 %v169, 1e-08
    %v186 = vmax.f32 %v170, 1e-08
    %v187 = vmax.f32 %v171, 1e-08
    %v188 = vmax.f32 %v172, 1e-08
    %v189 = vmax.f32 %v173, 1e-08
    %v190 = vmax.f32 %v174, 1e-08
    %v191 = vmax.f32 %v175, 1e-08
    %v192 = vmax.f32 %v176, 1e-08
    %v193 = vmax.f32 %v177, 1e-08
    %v194 = vmax.f32 %v178, 1e-08
    %v195 = vmax.f32 %v179, 1e-08
    %v196 = vmax.f32 %v180, 1e-08
    %v197 = vmax.f32 %v181, 1e-08
    %v198 = vmax.f32 %v182, 1e-08
    %v199 = vmax.f32 %v183, 1e-08
    %v200 = vsub.f32 1.0, %v137
    %v201 = vsub.f32 1.0, %v139
    %v202 = vsub.f32 1.0, %v141
    %v203 = vsub.f32 1.0, %v143
    %v204 = vsub.f32 1.0, %v145
    %v205 = vsub.f32 1.0, %v147
    %v206 = vsub.f32 1.0, %v149
    %v207 = vsub.f32 1.0, %v151
    %v208 = vsub.f32 1.0, %v153
    %v209 = vsub.f32 1.0, %v155
    %v210 = vsub.f32 1.0, %v157
    %v211 = vsub.f32 1.0, %v159
    %v212 = vsub.f32 1.0, %v161
    %v213 = vsub.f32 1.0, %v163
    %v214 = vsub.f32 1.0, %v165
    %v215 = vsub.f32 1.0, %v167
    %v216 = vadd.f32 %v200, 1e-08
    %v217 = vadd.f32 %v201, 1e-08
    %v218 = vadd.f32 %v202, 1e-08
    %v219 = vadd.f32 %v203, 1e-08
    %v220 = vadd.f32 %v204, 1e-08
    %v221 = vadd.f32 %v205, 1e-08
    %v222 = vadd.f32 %v206, 1e-08
    %v223 = vadd.f32 %v207, 1e-08
    %v224 = vadd.f32 %v208, 1e-08
    %v225 = vadd.f32 %v209, 1e-08
    %v226 = vadd.f32 %v210, 1e-08
    %v227 = vadd.f32 %v211, 1e-08
    %v228 = vadd.f32 %v212, 1e-08
    %v229 = vadd.f32 %v213, 1e-08
    %v230 = vadd.f32 %v214, 1e-08
    %v231 = vadd.f32 %v215, 1e-08
    %v232 = vmax.f32 %v216, 1e-08
    %v233 = vmax.f32 %v217, 1e-08
    %v234 = vmax.f32 %v218, 1e-08
    %v235 = vmax.f32 %v219, 1e-08
    %v236 = vmax.f32 %v220, 1e-08
    %v237 = vmax.f32 %v221, 1e-08
    %v238 = vmax.f32 %v222, 1e-08
    %v239 = vmax.f32 %v223, 1e-08
    %v240 = vmax.f32 %v224, 1e-08
    %v241 = vmax.f32 %v225, 1e-08
    %v242 = vmax.f32 %v226, 1e-08
    %v243 = vmax.f32 %v227, 1e-08
    %v244 = vmax.f32 %v228, 1e-08
    %v245 = vmax.f32 %v229, 1e-08
    %v246 = vmax.f32 %v230, 1e-08
    %v247 = vmax.f32 %v231, 1e-08
    %v248 = vlog2.pop %v184
    %v249 = vmul.f32 %v248, 0.6931472
    %v250 = vlog2.pop %v185
    %v251 = vmul.f32 %v250, 0.6931472
    %v252 = vlog2.pop %v186
    %v253 = vmul.f32 %v252, 0.6931472
    %v254 = vlog2.pop %v187
    %v255 = vmul.f32 %v254, 0.6931472
    %v256 = vlog2.pop %v188
    %v257 = vmul.f32 %v256, 0.6931472
    %v258 = vlog2.pop %v189
    %v259 = vmul.f32 %v258, 0.6931472
    %v260 = vlog2.pop %v190
    %v261 = vmul.f32 %v260, 0.6931472
    %v262 = vlog2.pop %v191
    %v263 = vmul.f32 %v262, 0.6931472
    %v264 = vlog2.pop %v192
    %v265 = vmul.f32 %v264, 0.6931472
    %v266 = vlog2.pop %v193
    %v267 = vmul.f32 %v266, 0.6931472
    %v268 = vlog2.pop %v194
    %v269 = vmul.f32 %v268, 0.6931472
    %v270 = vlog2.pop %v195
    %v271 = vmul.f32 %v270, 0.6931472
    %v272 = vlog2.pop %v196
    %v273 = vmul.f32 %v272, 0.6931472
    %v274 = vlog2.pop %v197
    %v275 = vmul.f32 %v274, 0.6931472
    %v276 = vlog2.pop %v198
    %v277 = vmul.f32 %v276, 0.6931472
    %v278 = vlog2.pop %v199
    %v279 = vmul.f32 %v278, 0.6931472
    %v280 = vlog2.pop %v232
    %v281 = vmul.f32 %v280, 0.6931472
    %v282 = vlog2.pop %v233
    %v283 = vmul.f32 %v282, 0.6931472
    %v284 = vlog2.pop %v234
    %v285 = vmul.f32 %v284, 0.6931472
    %v286 = vlog2.pop %v235
    %v287 = vmul.f32 %v286, 0.6931472
    %v288 = vlog2.pop %v236
    %v289 = vmul.f32 %v288, 0.6931472
    %v290 = vlog2.pop %v237
    %v291 = vmul.f32 %v290, 0.6931472
    %v292 = vlog2.pop %v238
    %v293 = vmul.f32 %v292, 0.6931472
    %v294 = vlog2.pop %v239
    %v295 = vmul.f32 %v294, 0.6931472
    %v296 = vlog2.pop %v240
    %v297 = vmul.f32 %v296, 0.6931472
    %v298 = vlog2.pop %v241
    %v299 = vmul.f32 %v298, 0.6931472
    %v300 = vlog2.pop %v242
    %v301 = vmul.f32 %v300, 0.6931472
    %v302 = vlog2.pop %v243
    %v303 = vmul.f32 %v302, 0.6931472
    %v304 = vlog2.pop %v244
    %v305 = vmul.f32 %v304, 0.6931472
    %v306 = vlog2.pop %v245
    %v307 = vmul.f32 %v306, 0.6931472
    %v308 = vlog2.pop %v246
    %v309 = vmul.f32 %v308, 0.6931472
    %v310 = vlog2.pop %v247
    %v311 = vmul.f32 %v310, 0.6931472
    %v312 = vmul.f32 %v232, %v232
    %v313 = vmul.f32 %v233, %v233
    %v314 = vmul.f32 %v234, %v234
    %v315 = vmul.f32 %v235, %v235
    %v316 = vmul.f32 %v236, %v236
    %v317 = vmul.f32 %v237, %v237
    %v318 = vmul.f32 %v238, %v238
    %v319 = vmul.f32 %v239, %v239
    %v320 = vmul.f32 %v240, %v240
    %v321 = vmul.f32 %v241, %v241
    %v322 = vmul.f32 %v242, %v242
    %v323 = vmul.f32 %v243, %v243
    %v324 = vmul.f32 %v244, %v244
    %v325 = vmul.f32 %v245, %v245
    %v326 = vmul.f32 %v246, %v246
    %v327 = vmul.f32 %v247, %v247
    %v328 = vmul.f32 %v184, %v184
    %v329 = vmul.f32 %v185, %v185
    %v330 = vmul.f32 %v186, %v186
    %v331 = vmul.f32 %v187, %v187
    %v332 = vmul.f32 %v188, %v188
    %v333 = vmul.f32 %v189, %v189
    %v334 = vmul.f32 %v190, %v190
    %v335 = vmul.f32 %v191, %v191
    %v336 = vmul.f32 %v192, %v192
    %v337 = vmul.f32 %v193, %v193
    %v338 = vmul.f32 %v194, %v194
    %v339 = vmul.f32 %v195, %v195
    %v340 = vmul.f32 %v196, %v196
    %v341 = vmul.f32 %v197, %v197
    %v342 = vmul.f32 %v198, %v198
    %v343 = vmul.f32 %v199, %v199
    %v344 = vmul.f32 %v312, -0.25
    %v345 = vmul.f32 %v313, -0.25
    %v346 = vmul.f32 %v314, -0.25
    %v347 = vmul.f32 %v315, -0.25
    %v348 = vmul.f32 %v316, -0.25
    %v349 = vmul.f32 %v317, -0.25
    %v350 = vmul.f32 %v318, -0.25
    %v351 = vmul.f32 %v319, -0.25
    %v352 = vmul.f32 %v320, -0.25
    %v353 = vmul.f32 %v321, -0.25
    %v354 = vmul.f32 %v322, -0.25
    %v355 = vmul.f32 %v323, -0.25
    %v356 = vmul.f32 %v324, -0.25
    %v357 = vmul.f32 %v325, -0.25
    %v358 = vmul.f32 %v326, -0.25
    %v359 = vmul.f32 %v327, -0.25
    %v360 = vmul.f32 %v344, %v56
    %v361 = vmul.f32 %v345, %v57
    %v362 = vmul.f32 %v346, %v58
    %v363 = vmul.f32 %v347, %v59
    %v364 = vmul.f32 %v348, %v60
    %v365 = vmul.f32 %v349, %v61
    %v366 = vmul.f32 %v350, %v62
    %v367 = vmul.f32 %v351, %v63
    %v368 = vmul.f32 %v352, %v64
    %v369 = vmul.f32 %v353, %v65
    %v370 = vmul.f32 %v354, %v66
    %v371 = vmul.f32 %v355, %v67
    %v372 = vmul.f32 %v356, %v68
    %v373 = vmul.f32 %v357, %v69
    %v374 = vmul.f32 %v358, %v70
    %v375 = vmul.f32 %v359, %v71
    %v376 = vmul.f32 %v360, %v249
    %v377 = vmul.f32 %v361, %v251
    %v378 = vmul.f32 %v362, %v253
    %v379 = vmul.f32 %v363, %v255
    %v380 = vmul.f32 %v364, %v257
    %v381 = vmul.f32 %v365, %v259
    %v382 = vmul.f32 %v366, %v261
    %v383 = vmul.f32 %v367, %v263
    %v384 = vmul.f32 %v368, %v265
    %v385 = vmul.f32 %v369, %v267
    %v386 = vmul.f32 %v370, %v269
    %v387 = vmul.f32 %v371, %v271
    %v388 = vmul.f32 %v372, %v273
    %v389 = vmul.f32 %v373, %v275
    %v390 = vmul.f32 %v374, %v277
    %v391 = vmul.f32 %v375, %v279
    %v392 = vmul.f32 %v328, -0.75
    %v393 = vmul.f32 %v329, -0.75
    %v394 = vmul.f32 %v330, -0.75
    %v395 = vmul.f32 %v331, -0.75
    %v396 = vmul.f32 %v332, -0.75
    %v397 = vmul.f32 %v333, -0.75
    %v398 = vmul.f32 %v334, -0.75
    %v399 = vmul.f32 %v335, -0.75
    %v400 = vmul.f32 %v336, -0.75
    %v401 = vmul.f32 %v337, -0.75
    %v402 = vmul.f32 %v338, -0.75
    %v403 = vmul.f32 %v339, -0.75
    %v404 = vmul.f32 %v340, -0.75
    %v405 = vmul.f32 %v341, -0.75
    %v406 = vmul.f32 %v342, -0.75
    %v407 = vmul.f32 %v343, -0.75
    %v408 = vsub.f32 1.0, %v56
    %v409 = vsub.f32 1.0, %v57
    %v410 = vsub.f32 1.0, %v58
    %v411 = vsub.f32 1.0, %v59
    %v412 = vsub.f32 1.0, %v60
    %v413 = vsub.f32 1.0, %v61
    %v414 = vsub.f32 1.0, %v62
    %v415 = vsub.f32 1.0, %v63
    %v416 = vsub.f32 1.0, %v64
    %v417 = vsub.f32 1.0, %v65
    %v418 = vsub.f32 1.0, %v66
    %v419 = vsub.f32 1.0, %v67
    %v420 = vsub.f32 1.0, %v68
    %v421 = vsub.f32 1.0, %v69
    %v422 = vsub.f32 1.0, %v70
    %v423 = vsub.f32 1.0, %v71
    %v424 = vmul.f32 %v392, %v408
    %v425 = vmul.f32 %v393, %v409
    %v426 = vmul.f32 %v394, %v410
    %v427 = vmul.f32 %v395, %v411
    %v428 = vmul.f32 %v396, %v412
    %v429 = vmul.f32 %v397, %v413
    %v430 = vmul.f32 %v398, %v414
    %v431 = vmul.f32 %v399, %v415
    %v432 = vmul.f32 %v400, %v416
    %v433 = vmul.f32 %v401, %v417
    %v434 = vmul.f32 %v402, %v418
    %v435 = vmul.f32 %v403, %v419
    %v436 = vmul.f32 %v404, %v420
    %v437 = vmul.f32 %v405, %v421
    %v438 = vmul.f32 %v406, %v422
    %v439 = vmul.f32 %v407, %v423
    %v440 = vmul.f32 %v424, %v281
    %v441 = vmul.f32 %v425, %v283
    %v442 = vmul.f32 %v426, %v285
    %v443 = vmul.f32 %v427, %v287
    %v444 = vmul.f32 %v428, %v289
    %v445 = vmul.f32 %v429, %v291
    %v446 = vmul.f32 %v430, %v293
    %v447 = vmul.f32 %v431, %v295
    %v448 = vmul.f32 %v432, %v297
    %v449 = vmul.f32 %v433, %v299
    %v450 = vmul.f32 %v434, %v301
    %v451 = vmul.f32 %v435, %v303
    %v452 = vmul.f32 %v436, %v305
    %v453 = vmul.f32 %v437, %v307
    %v454 = vmul.f32 %v438, %v309
    %v455 = vmul.f32 %v439, %v311
    %v456 = vadd.f32 %v376, %v440
    %v457 = vadd.f32 %v377, %v441
    %v458 = vadd.f32 %v378, %v442
    %v459 = vadd.f32 %v379, %v443
    %v460 = vadd.f32 %v380, %v444
    %v461 = vadd.f32 %v381, %v445
    %v462 = vadd.f32 %v382, %v446
    %v463 = vadd.f32 %v383, %v447
    %v464 = vadd.f32 %v384, %v448
    %v465 = vadd.f32 %v385, %v449
    %v466 = vadd.f32 %v386, %v450
    %v467 = vadd.f32 %v387, %v451
    %v468 = vadd.f32 %v388, %v452
    %v469 = vadd.f32 %v389, %v453
    %v470 = vadd.f32 %v390, %v454
    %v471 = vadd.f32 %v391, %v455
    %472 = vst [vmem:[#allocation7] sm:$0xff] %v456
    %473 = vst [vmem:[#allocation7 + $0x8] sm:$0xff] %v457
    %474 = vst [vmem:[#allocation7 + $0x10] sm:$0xff] %v458
    %475 = vst [vmem:[#allocation7 + $0x18] sm:$0xff] %v459
    %476 = vst [vmem:[#allocation7 + $0x20] sm:$0xff] %v460
    %477 = vst [vmem:[#allocation7 + $0x28] sm:$0xff] %v461
    %478 = vst [vmem:[#allocation7 + $0x30] sm:$0xff] %v462
    %479 = vst [vmem:[#allocation7 + $0x38] sm:$0xff] %v463
    %480 = vst [vmem:[#allocation7 + $0x40] sm:$0xff] %v464
    %481 = vst [vmem:[#allocation7 + $0x48] sm:$0xff] %v465
    %482 = vst [vmem:[#allocation7 + $0x50] sm:$0xff] %v466
    %483 = vst [vmem:[#allocation7 + $0x58] sm:$0xff] %v467
    %484 = vst [vmem:[#allocation7 + $0x60] sm:$0xff] %v468
    %485 = vst [vmem:[#allocation7 + $0x68] sm:$0xff] %v469
    %486 = vst [vmem:[#allocation7 + $0x70] sm:$0xff] %v470
    %487 = vst [vmem:[#allocation7 + $0x78] sm:$0xff] %v471
    // Predicated region
    $region18: #{tpu_custom_call.1} parent=1 // pred_check
      _
    $region19: #{tpu_custom_call.1} parent=1 // pred_check_branch
      %489 = sbr.rel (0) target = $region21
    $region20: #{tpu_custom_call.1} parent=1 // pred_region
      %s491 = ssub.s32 2048, 2048
      %492 = vsyncadd [#allocation4], %s491
      %s493 = sshll.u32 [#allocation7], 4
      %s494 = int_to_ptr.vmem [resolvable:$true] %s493
      %499 = dma.vmem_to_hbm [thread:$0]  %s494, 2048, %s2, [#allocation4], 1024, 1024, 64
    $region21: #{tpu_custom_call.1} parent=1 // pred_fallthru
      _
    // Predicated region
    $region22: #{tpu_custom_call.1} parent=1 // pred_check
      _
    $region23: #{tpu_custom_call.1} parent=1 // pred_check_branch
      %501 = sbr.rel (0) target = $region25
    $region24: #{tpu_custom_call.1} parent=1 // pred_region
      %502 = dma.done [#allocation4], 2048
    $region25: #{tpu_custom_call.1} parent=1 // pred_fallthru
      _
    %503 = vsyncpa [#allocation3], 1
    %504 = vsyncpa [#allocation6], 1
    %505 = vsyncpa [#allocation4], 1

</llo_original>
